<compile_context>
chip_gen: v6e
topology: v6e:2x2x1
jax: 0.10.0
libtpu: 0.0.40
codegen_flags: <defaults>
</compile_context>

<pallas_src>
import numpy as np
import jax
import jax.numpy as jnp
from jax.experimental import pallas as pl
from jax.experimental.pallas import tpu as pltpu


# ---------------- filter coefficient computation (plain Python, matches PyTorch) ---------
def A(p_delta, scheme):
    if scheme == 'CD':
        return 1 - 0.5 * p_delta
    elif scheme == 'FUS' or scheme == 'SUS':
        return 1
    elif scheme == 'HS':
        return max(0, 1 - 0.5 * p_delta)
    elif scheme == 'ES':
        return p_delta / (np.exp(p_delta) - 1)
    elif scheme == 'PLS':
        return max(0, np.power(1 - 0.1 * p_delta, 5))
    else:
        return 0


def compute_coefficient(F_x, F_y, gamma, delta_xy, scheme):
    p_delta_lr = F_x * delta_xy / gamma
    p_delta_ud = F_y * delta_xy / gamma
    a_E = A(abs(p_delta_lr), scheme=scheme) + max(-p_delta_lr, 0)
    a_W = A(abs(p_delta_lr), scheme=scheme) + max(p_delta_lr, 0)
    a_N = A(abs(p_delta_ud), scheme=scheme) + max(-p_delta_ud, 0)
    a_S = A(abs(p_delta_ud), scheme=scheme) + max(p_delta_ud, 0)
    a_P = a_E + a_W + a_N + a_S
    # derivative_filter = [[[[0, a_S, 0], [a_W, -a_P, a_E], [0, a_N, 0]]]]
    return a_E, a_W, a_N, a_S, a_P


# ---------------- Pallas kernel ----------------------------------------------------------
def _stencil_kernel(coef_ref, x_ref, o_ref):
    # coef_ref: SMEM (5,) f32 = [a_E, a_W, a_N, a_S, a_P]
    # x_ref:    VMEM (nb, H, W)   (size-1 channel dim squeezed out)
    # o_ref:    VMEM (nb, Ho, Wo)
    Ho = o_ref.shape[1]
    Wo = o_ref.shape[2]
    a_E = coef_ref[0]
    a_W = coef_ref[1]
    a_N = coef_ref[2]
    a_S = coef_ref[3]
    a_P = coef_ref[4]

    # Five direct ref-sliced loads (not slices of a loaded value) -> shifted vector
    # loads, no extra tile-sized VMEM copies.  Cross-correlation taps of the filter
    # [[0, a_S, 0], [a_W, -a_P, a_E], [0, a_N, 0]]:
    south  = x_ref[:, 0:Ho,     1:1 + Wo]   # filter[0,1] = a_S  -> x[h,   w+1]
    west   = x_ref[:, 1:1 + Ho, 0:Wo]       # filter[1,0] = a_W  -> x[h+1, w  ]
    center = x_ref[:, 1:1 + Ho, 1:1 + Wo]   # filter[1,1] = -a_P -> x[h+1, w+1]
    east   = x_ref[:, 1:1 + Ho, 2:2 + Wo]   # filter[1,2] = a_E  -> x[h+1, w+2]
    north  = x_ref[:, 2:2 + Ho, 1:1 + Wo]   # filter[2,1] = a_N  -> x[h+2, w+1]

    out = a_S * south + a_W * west - a_P * center + a_E * east + a_N * north
    o_ref[...] = out.astype(o_ref.dtype)


# ---------------- block sizing ------------------------------------------------------------
def _vmem_tile_bytes(h, w, itemsize):
    # f32 VMEM layout pads the last two dims to (8, 128) tiles.
    return ((h + 7) // 8) * 8 * ((w + 127) // 128) * 128 * itemsize


def _choose_batch_block(N, H, W, Ho, Wo, itemsize):
    # Per-generation VMEM budget (v7x: 64 MiB physical, v5e/v6e: 128 MiB).
    try:
        vmem_cap = int(pltpu.get_tpu_info().vmem_capacity_bytes)
    except Exception:
        vmem_cap = 64 * 1024 * 1024          # conservative fallback (v7x size)
    vmem_limit = min(vmem_cap * 3 // 4, 96 * 1024 * 1024)
    block_budget = int(vmem_limit * 0.7)

    in_vmem = _vmem_tile_bytes(H, W, itemsize)
    out_vmem = _vmem_tile_bytes(Ho, Wo, itemsize)
    # Real per-image footprint: double-buffered input + output blocks plus ~6
    # output-sized temporaries (tap values / accumulator) live inside the kernel.
    per_img_vmem = 2 * in_vmem + 2 * out_vmem + 6 * out_vmem
    per_img_hbm = (H * W + Ho * Wo) * itemsize

    divisors = [d for d in range(1, N + 1) if N % d == 0]
    fit = [d for d in divisors if d * per_img_vmem <= block_budget] or [1]
    nb = fit[-1]
    # Prefer >=4 grid steps (2 per v7x TensorCore, keeps DMA/compute overlap) as long
    # as each step still moves >= ~1 MiB of HBM data (per-step overhead ~0.35 us).
    for d in reversed(fit):
        if N // d >= 4 and d * per_img_hbm >= (1 << 20):
            nb = d
            break
    return nb, int(vmem_limit)


# ---------------- wrapper -----------------------------------------------------------------
def conv2d_derivative(x, F_x, F_y, gamma, delta_xy, scheme):
    """x: (N, 1, H, W) float32 -> (N, 1, H-2, W-2) float32 (valid 3x3 stencil conv)."""
    a_E, a_W, a_N, a_S, a_P = compute_coefficient(F_x, F_y, gamma, delta_xy, scheme)
    coefs = jnp.asarray([a_E, a_W, a_N, a_S, a_P], dtype=jnp.float32)

    N, C, H, W = x.shape
    assert C == 1, "Conv2dDerivative expects a single input channel"
    assert H >= 3 and W >= 3, "need at least 3x3 spatial extent"
    Ho, Wo = H - 2, W - 2

    nb, vmem_limit = _choose_batch_block(N, H, W, Ho, Wo, x.dtype.itemsize)
    grid = (N // nb,)

    return pl.pallas_call(
        _stencil_kernel,
        out_shape=jax.ShapeDtypeStruct((N, 1, Ho, Wo), x.dtype),
        grid_spec=pltpu.PrefetchScalarGridSpec(
            num_scalar_prefetch=0,
            grid=grid,
            in_specs=[
                # Coefficients live in SMEM: no retrace when parameters change.
                pl.BlockSpec(memory_space=pltpu.MemorySpace.SMEM),
                # Full spatial dims (full-array-dim exemption): no width padding.
                pl.BlockSpec((nb, pl.Squeezed(), H, W), lambda n: (n, 0, 0, 0)),
            ],
            out_specs=pl.BlockSpec((nb, pl.Squeezed(), Ho, Wo),
                                   lambda n: (n, 0, 0, 0)),
        ),
        compiler_params=pltpu.CompilerParams(
            dimension_semantics=("parallel",),
            vmem_limit_bytes=vmem_limit,
        ),
    )(coefs, x)


# ---------------- reference (plain JAX) for verification ---------------------------------
def conv2d_derivative_ref(x, F_x, F_y, gamma, delta_xy, scheme):
    a_E, a_W, a_N, a_S, a_P = compute_coefficient(F_x, F_y, gamma, delta_xy, scheme)
    filt = jnp.array([[[[0.0, a_S, 0.0],
                        [a_W, -a_P, a_E],
                        [0.0, a_N, 0.0]]]], dtype=jnp.float32)  # OIHW
    return jax.lax.conv_general_dilated(
        x, filt, window_strides=(1, 1), padding="VALID",
        dimension_numbers=("NCHW", "OIHW", "NCHW"))


if __name__ == "__main__":
    # Deterministic "module parameters" (would be __init__ args in PyTorch)
    F_x, F_y, gamma, delta_xy, scheme = 1.0, 0.5, 0.1, 0.05, "HS"

    key = jax.random.PRNGKey(0)
    x = jax.random.normal(key, (2, 1, 16, 16), dtype=jnp.float32)

    out = conv2d_derivative(x, F_x, F_y, gamma, delta_xy, scheme)
    out = jax.block_until_ready(out)

    ref = jax.block_until_ready(
        conv2d_derivative_ref(x, F_x, F_y, gamma, delta_xy, scheme))
    np.testing.assert_allclose(np.asarray(out), np.asarray(ref),
                               rtol=1e-5, atol=1e-5)

    print("KERNEL_OK")
</pallas_src>

<mosaic_0001>
module attributes {stable_mosaic.version = 11 : i64} {
  func.func @_stencil_kernel(%arg0: i32, %arg1: memref<5xf32, #tpu.memory_space<smem>>, %arg2: memref<2x1x16x16xf32, #tpu.memory_space<vmem>>, %arg3: memref<2x1x14x14xf32, #tpu.memory_space<vmem>>) attributes {dimension_semantics = [#tpu.dimension_semantics<parallel>], iteration_bounds = array<i64: 1>, scalar_prefetch = 0 : i64, scratch_operands = 0 : i64, tpu.core_type = #tpu.core_type<tc>, window_params = [{transform_indices = @transform_0, window_bounds = array<i64: 5>}, {transform_indices = @transform_1, window_bounds = array<i64: 2, 1, 16, 16>}, {transform_indices = @transform_2, window_bounds = array<i64: 2, 1, 14, 14>}]} {
    %c0 = arith.constant 0 : index
    %0 = memref.load %arg1[%c0] : memref<5xf32, #tpu.memory_space<smem>>
    %c1 = arith.constant 1 : index
    %1 = memref.load %arg1[%c1] : memref<5xf32, #tpu.memory_space<smem>>
    %c2 = arith.constant 2 : index
    %2 = memref.load %arg1[%c2] : memref<5xf32, #tpu.memory_space<smem>>
    %c3 = arith.constant 3 : index
    %3 = memref.load %arg1[%c3] : memref<5xf32, #tpu.memory_space<smem>>
    %c4 = arith.constant 4 : index
    %4 = memref.load %arg1[%c4] : memref<5xf32, #tpu.memory_space<smem>>
    %c0_0 = arith.constant 0 : index
    %c0_1 = arith.constant 0 : index
    %c0_2 = arith.constant 0 : index
    %c1_3 = arith.constant 1 : index
    %5 = vector.load %arg2[%c0_0, %c0_1, %c0_2, %c1_3] : memref<2x1x16x16xf32, #tpu.memory_space<vmem>>, vector<2x1x14x14xf32>
    %6 = vector.shape_cast %5 : vector<2x1x14x14xf32> to vector<2x14x14xf32>
    %c0_4 = arith.constant 0 : index
    %c0_5 = arith.constant 0 : index
    %c1_6 = arith.constant 1 : index
    %c0_7 = arith.constant 0 : index
    %7 = vector.load %arg2[%c0_4, %c0_5, %c1_6, %c0_7] : memref<2x1x16x16xf32, #tpu.memory_space<vmem>>, vector<2x1x14x14xf32>
    %8 = vector.shape_cast %7 : vector<2x1x14x14xf32> to vector<2x14x14xf32>
    %c0_8 = arith.constant 0 : index
    %c0_9 = arith.constant 0 : index
    %c1_10 = arith.constant 1 : index
    %c1_11 = arith.constant 1 : index
    %9 = vector.load %arg2[%c0_8, %c0_9, %c1_10, %c1_11] : memref<2x1x16x16xf32, #tpu.memory_space<vmem>>, vector<2x1x14x14xf32>
    %10 = vector.shape_cast %9 : vector<2x1x14x14xf32> to vector<2x14x14xf32>
    %c0_12 = arith.constant 0 : index
    %c0_13 = arith.constant 0 : index
    %c1_14 = arith.constant 1 : index
    %c2_15 = arith.constant 2 : index
    %11 = vector.load %arg2[%c0_12, %c0_13, %c1_14, %c2_15] : memref<2x1x16x16xf32, #tpu.memory_space<vmem>>, vector<2x1x14x14xf32>
    %12 = vector.shape_cast %11 : vector<2x1x14x14xf32> to vector<2x14x14xf32>
    %c0_16 = arith.constant 0 : index
    %c0_17 = arith.constant 0 : index
    %c2_18 = arith.constant 2 : index
    %c1_19 = arith.constant 1 : index
    %13 = vector.load %arg2[%c0_16, %c0_17, %c2_18, %c1_19] : memref<2x1x16x16xf32, #tpu.memory_space<vmem>>, vector<2x1x14x14xf32>
    %14 = vector.shape_cast %13 : vector<2x1x14x14xf32> to vector<2x14x14xf32>
    %15 = vector.broadcast %3 : f32 to vector<2x14x14xf32>
    %16 = arith.mulf %15, %6 : vector<2x14x14xf32>
    %17 = vector.broadcast %1 : f32 to vector<2x14x14xf32>
    %18 = arith.mulf %17, %8 : vector<2x14x14xf32>
    %19 = arith.addf %16, %18 : vector<2x14x14xf32>
    %20 = vector.broadcast %4 : f32 to vector<2x14x14xf32>
    %21 = arith.mulf %20, %10 : vector<2x14x14xf32>
    %22 = arith.subf %19, %21 : vector<2x14x14xf32>
    %23 = vector.broadcast %0 : f32 to vector<2x14x14xf32>
    %24 = arith.mulf %23, %12 : vector<2x14x14xf32>
    %25 = arith.addf %22, %24 : vector<2x14x14xf32>
    %26 = vector.broadcast %2 : f32 to vector<2x14x14xf32>
    %27 = arith.mulf %26, %14 : vector<2x14x14xf32>
    %28 = arith.addf %25, %27 : vector<2x14x14xf32>
    %c0_20 = arith.constant 0 : index
    %c0_21 = arith.constant 0 : index
    %c0_22 = arith.constant 0 : index
    %c0_23 = arith.constant 0 : index
    %29 = vector.load %arg3[%c0_20, %c0_21, %c0_22, %c0_23] : memref<2x1x14x14xf32, #tpu.memory_space<vmem>>, vector<2x1x14x14xf32>
    %30 = vector.shape_cast %29 : vector<2x1x14x14xf32> to vector<2x14x14xf32>
    %31 = vector.shape_cast %28 : vector<2x14x14xf32> to vector<2x1x14x14xf32>
    tpu.vector_store %arg3[%c0_20, %c0_21, %c0_22, %c0_23], %31 {strides = array<i32>} : memref<2x1x14x14xf32, #tpu.memory_space<vmem>>, vector<2x1x14x14xf32>,
    return
  }
  func.func @transform_0(%arg0: i32) -> i32 {
    %c0_i32 = arith.constant 0 : i32
    %c0_i32_0 = arith.constant 0 : i32
    return %c0_i32 : i32
  }
  func.func @transform_1(%arg0: i32) -> (i32, i32, i32, i32) {
    %c0_i32 = arith.constant 0 : i32
    %c0_i32_0 = arith.constant 0 : i32
    %c0_i32_1 = arith.constant 0 : i32
    %c0_i32_2 = arith.constant 0 : i32
    return %arg0, %c0_i32, %c0_i32_0, %c0_i32_1 : i32, i32, i32, i32
  }
  func.func @transform_2(%arg0: i32) -> (i32, i32, i32, i32) {
    %c0_i32 = arith.constant 0 : i32
    %c0_i32_0 = arith.constant 0 : i32
    %c0_i32_1 = arith.constant 0 : i32
    %c0_i32_2 = arith.constant 0 : i32
    return %arg0, %c0_i32, %c0_i32_0, %c0_i32_1 : i32, i32, i32, i32
  }
}

</mosaic_0001>

<llo_original>
// kernel: tpu_custom_call.1
$region0: #{tpu_custom_call.1}
  #allocation0 [shape = 'u32[]', space=smem, size = 0x4, offset = 0x4, fixed_abs, tag = 'smem constant byte address 0x4 - core index']
  #allocation1 [shape = 'u32[144,128]{1,0:T(1,128)}', space=vmem, size = 0x12000, scoped, tag = 'internal scratch']
  %s0 = inlined_call_operand.hbm [shape: f32[5], index: 0, kind: input, shape index: {}]
  %s1 = inlined_call_operand.hbm [shape: f32[2,1,16,16], index: 1, kind: input, shape index: {}]
  %s2 = inlined_call_operand.vmem [shape: f32[2,1,14,14], index: 2, kind: output, shape index: {}]
  %s3 = sld [smem:[#allocation0]]
  $region26: #{tpu_custom_call.1} parent=0
    _
  %s5 = ssub.s32 1, %s3
  %s6 = scalar_select 0, %s5, %s3
  $region1: #{tpu_custom_call.1} parent=0
    #allocation2 [shape = 'u8[512]{0}', space=smem, size = 0x200, scoped, tag = 'input window, operand 0, single buffered']
    #allocation3 [shape = 's32[1]{0}', space=sflag, size = 0x4, scoped, tag = 'scoped memory for tpu_custom_call.1']
    #allocation4 [shape = 's32[1]{0}', space=sflag, size = 0x4, scoped, tag = 'scoped memory for tpu_custom_call.1']
    #allocation5 [shape = 'u8[16384]{0}', space=vmem, size = 0x4000, scoped, tag = 'input window, operand 1, single buffered']
    %7 = vsyncpa [#allocation4], 0
    %8 = vsyncpa [#allocation3], 0
    // Predicated region
    $region2: #{tpu_custom_call.1} parent=1 // pred_check
      _
    $region3: #{tpu_custom_call.1} parent=1 // pred_check_branch
      %10 = sbr.rel (0) target = $region5
    $region4: #{tpu_custom_call.1} parent=1 // pred_region
      %s12 = ssub.s32 16, 16
      %13 = vsyncadd [#allocation4], %s12
      %16 = dma.hbm_to_smem %s0, 16, [#allocation2], [#allocation4]
    $region5: #{tpu_custom_call.1} parent=1 // pred_fallthru
      _
    // Predicated region
    $region6: #{tpu_custom_call.1} parent=1 // pred_check
      _
    $region7: #{tpu_custom_call.1} parent=1 // pred_check_branch
      %18 = sbr.rel (0) target = $region9
    $region8: #{tpu_custom_call.1} parent=1 // pred_region
      %s20 = ssub.s32 512, 512
      %21 = vsyncadd [#allocation3], %s20
      %s22 = sshll.u32 [#allocation5], 4
      %s23 = int_to_ptr.vmem [resolvable:$true] %s22
      %28 = dma.hbm_to_vmem [thread:$0]  %s1, 512, %s23, [#allocation3], 128, 128, 8
    $region9: #{tpu_custom_call.1} parent=1 // pred_fallthru
      _
    // Predicated region
    $region10: #{tpu_custom_call.1} parent=1 // pred_check
      _
    $region11: #{tpu_custom_call.1} parent=1 // pred_check_branch
      %30 = sbr.rel (0) target = $region13
    $region12: #{tpu_custom_call.1} parent=1 // pred_region
      %31 = dma.done [#allocation4], 16
    $region13: #{tpu_custom_call.1} parent=1 // pred_fallthru
      _
    // Predicated region
    $region14: #{tpu_custom_call.1} parent=1 // pred_check
      _
    $region15: #{tpu_custom_call.1} parent=1 // pred_check_branch
      %33 = sbr.rel (0) target = $region17
    $region16: #{tpu_custom_call.1} parent=1 // pred_region
      %34 = dma.done [#allocation3], 512
    $region17: #{tpu_custom_call.1} parent=1 // pred_fallthru
      _
    %35 = sfence
    %s36 = sld [smem:[#allocation2]]
    %s37 = sld [smem:[#allocation2 + $0x1]]
    %s38 = sld [smem:[#allocation2 + $0x2]]
    %s39 = sld [smem:[#allocation2 + $0x3]]
    %s40 = sld [smem:[#allocation2 + $0x4]]
    %v41 = vld [vmem:[#allocation5] sm:$0xff]
    %v42 = vld [vmem:[#allocation5 + $0x8] sm:$0x3f]
    %v43 = vld [vmem:[#allocation5 + $0x10] sm:$0xff]
    %v44 = vld [vmem:[#allocation5 + $0x18] sm:$0x3f]
    %v45 = vld [vmem:[#allocation5 + $0x1] sm:$0xff]
    %v46 = vld [vmem:[#allocation5 + $0x9] sm:$0x3f]
    %v47 = vld [vmem:[#allocation5 + $0x11] sm:$0xff]
    %v48 = vld [vmem:[#allocation5 + $0x19] sm:$0x3f]
    %v49 = vld [vmem:[#allocation5 + $0x2] sm:$0xff]
    %v50 = vld [vmem:[#allocation5 + $0xa] sm:$0x3f]
    %v51 = vld [vmem:[#allocation5 + $0x12] sm:$0xff]
    %v52 = vld [vmem:[#allocation5 + $0x1a] sm:$0x3f]
    %v53 = vstv %s39
    %v54 = vmul.f32 %v53, %v41
    %v55 = vmul.f32 %v53, %v42
    %v56 = vmul.f32 %v53, %v43
    %v57 = vmul.f32 %v53, %v44
    %v58 = vstv %s37
    %v59 = vmul.f32 %v58, %v45
    %v60 = vmul.f32 %v58, %v46
    %v61 = vmul.f32 %v58, %v47
    %v62 = vmul.f32 %v58, %v48
    %67 = vrot.lane.b32.xlu0 %v59, 1
    %v68 = vpop.permute.xlu0 %67
    %69 = vrot.lane.b32.xlu0 %v60, 1
    %v70 = vpop.permute.xlu0 %69
    %71 = vrot.lane.b32.xlu0 %v61, 1
    %v72 = vpop.permute.xlu0 %71
    %73 = vrot.lane.b32.xlu0 %v62, 1
    %v74 = vpop.permute.xlu0 %73
    %v79 = vadd.f32 %v54, %v68
    %v80 = vadd.f32 %v55, %v70
    %v81 = vadd.f32 %v56, %v72
    %v82 = vadd.f32 %v57, %v74
    %v83 = vstv %s40
    %v84 = vmul.f32 %v83, %v45
    %v85 = vmul.f32 %v83, %v46
    %v86 = vmul.f32 %v83, %v47
    %v87 = vmul.f32 %v83, %v48
    %v88 = vsub.f32 %v79, %v84
    %v89 = vsub.f32 %v80, %v85
    %v90 = vsub.f32 %v81, %v86
    %v91 = vsub.f32 %v82, %v87
    %v92 = vstv %s36
    %v93 = vmul.f32 %v92, %v45
    %v94 = vmul.f32 %v92, %v46
    %v95 = vmul.f32 %v92, %v47
    %v96 = vmul.f32 %v92, %v48
    %101 = vrot.lane.b32.xlu0 %v93, 127
    %v102 = vpop.permute.xlu0 %101
    %103 = vrot.lane.b32.xlu0 %v94, 127
    %v104 = vpop.permute.xlu0 %103
    %105 = vrot.lane.b32.xlu0 %v95, 127
    %v106 = vpop.permute.xlu0 %105
    %107 = vrot.lane.b32.xlu0 %v96, 127
    %v108 = vpop.permute.xlu0 %107
    %v113 = vadd.f32 %v88, %v102
    %v114 = vadd.f32 %v89, %v104
    %v115 = vadd.f32 %v90, %v106
    %v116 = vadd.f32 %v91, %v108
    %v117 = vstv %s38
    %v118 = vmul.f32 %v117, %v49
    %v119 = vmul.f32 %v117, %v50
    %v120 = vmul.f32 %v117, %v51
    %v121 = vmul.f32 %v117, %v52
    %v122 = vadd.f32 %v113, %v118
    %v123 = vadd.f32 %v114, %v119
    %v124 = vadd.f32 %v115, %v120
    %v125 = vadd.f32 %v116, %v121
    %130 = vrot.lane.b32.xlu0 %v122, 127
    %v131 = vpop.permute.xlu0 %130
    %132 = vrot.lane.b32.xlu0 %v123, 127
    %v133 = vpop.permute.xlu0 %132
    %134 = vrot.lane.b32.xlu0 %v124, 127
    %v135 = vpop.permute.xlu0 %134
    %136 = vrot.lane.b32.xlu0 %v125, 127
    %v137 = vpop.permute.xlu0 %136
    %vm142 = vcmask 113664
    %143 = vst.msk [vmem:[%s2] sm:$0xff] %vm142, %v131
    %vm144 = vcmask 111616
    %145 = vst.msk [vmem:[%s2 + $0x8] sm:$0x3f] %vm144, %v133
    %146 = vst.msk [vmem:[%s2 + $0x10] sm:$0xff] %vm142, %v135
    %147 = vst.msk [vmem:[%s2 + $0x18] sm:$0x3f] %vm144, %v137
    // Predicated region
    $region18: #{tpu_custom_call.1} parent=1 // pred_check
      _
    $region19: #{tpu_custom_call.1} parent=1 // pred_check_branch
      %149 = sbr.rel (0) target = $region21
    $region20: #{tpu_custom_call.1} parent=1 // pred_region
      _
    $region21: #{tpu_custom_call.1} parent=1 // pred_fallthru
      _
    // Predicated region
    $region22: #{tpu_custom_call.1} parent=1 // pred_check
      _
    $region23: #{tpu_custom_call.1} parent=1 // pred_check_branch
      %151 = sbr.rel (0) target = $region25
    $region24: #{tpu_custom_call.1} parent=1 // pred_region
      _
    $region25: #{tpu_custom_call.1} parent=1 // pred_fallthru
      _
    %152 = vsyncpa [#allocation3], 1
    %153 = vsyncpa [#allocation4], 1

</llo_original>
